<compile_context>
chip_gen: v7x
topology: tpu7x:2x2x1
jax: 0.10.0
libtpu: 0.0.40
codegen_flags: <defaults>
</compile_context>

<pallas_src>
import functools
import math

import jax
import jax.numpy as jnp
from jax import lax
from jax.experimental import pallas as pl
from jax.experimental.pallas import tpu as pltpu


# ---------------------------------------------------------------------------
# Shared tiling helper
# ---------------------------------------------------------------------------
def _choose_tile_rows(tile_rows, n_rows, lane_w, *,
                      target_bytes=2 * 1024 * 1024, min_grid_steps=4):
    """~2 MiB f32 output blocks, rows a multiple of 8, and enough grid steps
    that the 'parallel' axis can be split across v7x's two TensorCores."""
    rup8 = lambda v: ((max(v, 1) + 7) // 8) * 8
    if tile_rows is None:
        tile_rows = target_bytes // (lane_w * 4)
    split_cap = rup8(-(-n_rows // min_grid_steps))   # aim for >= 4 grid steps
    tile_rows = min(tile_rows, split_cap, rup8(n_rows), 4096)
    return max(8, rup8(tile_rows))


# ---------------------------------------------------------------------------
# Path A: MXU one-hot gather from a VMEM-resident precomputed table.
# ---------------------------------------------------------------------------
def _table_gather_kernel(idx_ref, hi_ref, lo_ref, out_ref):
    # idx_ref: (TN, 1) int32 ; hi/lo: (CLp, D) bf16 resident ; out: (TN, D) f32
    tn = idx_ref.shape[0]
    clp = hi_ref.shape[0]
    idx = idx_ref[...]                                              # (TN, 1)
    lane_pos = lax.broadcasted_iota(jnp.int32, (tn, clp), 1)        # (TN, CLp)
    onehot = (lane_pos == idx).astype(jnp.bfloat16)                 # exact in bf16
    acc = jnp.dot(onehot, hi_ref[...], preferred_element_type=jnp.float32)
    acc = acc + jnp.dot(onehot, lo_ref[...], preferred_element_type=jnp.float32)
    out_ref[...] = acc


@functools.lru_cache(maxsize=None)
def _pe_table_hi_lo(context_length, embed_dim):
    """(CL, D) table exactly as the PyTorch __init__, split into bf16 hi/lo."""
    cl_pad = -(-context_length // 8) * 8
    pos = jnp.arange(context_length, dtype=jnp.float32)
    even_dims = jnp.arange(0, embed_dim, 2, dtype=jnp.float32)
    scale = 10000.0 ** (-even_dims / embed_dim)
    scaled = pos[:, None] * scale
    tab = jnp.zeros((cl_pad, embed_dim), jnp.float32)
    tab = tab.at[:context_length, 0::2].set(jnp.sin(scaled))
    tab = tab.at[:context_length, 1::2].set(jnp.cos(scaled))
    hi = tab.astype(jnp.bfloat16)
    lo = (tab - hi.astype(jnp.float32)).astype(jnp.bfloat16)
    return hi, lo


def _gather_path(flat_idx, context_length, embed_dim, tile_rows):
    n = flat_idx.shape[0]
    hi, lo = _pe_table_hi_lo(int(context_length), int(embed_dim))
    cl_pad = hi.shape[0]
    tile_rows = _choose_tile_rows(tile_rows, n, embed_dim)
    n_pad = -(-n // tile_rows) * tile_rows
    idx2 = jnp.pad(flat_idx, (0, n_pad - n)).reshape(n_pad, 1)      # pad -> row 0, sliced away
    out = pl.pallas_call(
        _table_gather_kernel,
        out_shape=jax.ShapeDtypeStruct((n_pad, embed_dim), jnp.float32),
        grid_spec=pltpu.PrefetchScalarGridSpec(
            num_scalar_prefetch=0,
            grid=(n_pad // tile_rows,),
            in_specs=[
                pl.BlockSpec((tile_rows, 1), lambda i: (i, 0)),        # indices
                pl.BlockSpec((cl_pad, embed_dim), lambda i: (0, 0)),   # resident table (hi)
                pl.BlockSpec((cl_pad, embed_dim), lambda i: (0, 0)),   # resident table (lo)
            ],
            out_specs=pl.BlockSpec((tile_rows, embed_dim), lambda i: (i, 0)),
        ),
        compiler_params=pltpu.CompilerParams(dimension_semantics=("parallel",)),
    )(idx2, hi, lo)
    return out[:n]


# ---------------------------------------------------------------------------
# Path B: sin-recompute fallback (lane-packed, one sin per element).
# ---------------------------------------------------------------------------
def _sin_pe_kernel(idx_ref, coef_ref, out_ref, *, k, d):
    # idx_ref : (TN, k)   int32 -- k positions packed per output row
    # coef_ref: (2, k*d)  f32   -- row 0: tiled scale factors, row 1: tiled phase
    # out_ref : (TN, k*d) f32   -- lane-dense (k*d is a multiple of 128)
    tn = idx_ref.shape[0]
    idx = idx_ref[...].astype(jnp.float32)                          # (TN, k)
    if k > 1:
        # Expand each packed position to its D-wide slot with lane broadcasts +
        # a minor-dim concatenate (XLU), instead of k masked mul-adds (VALU).
        cols = [jnp.broadcast_to(idx[:, j:j + 1], (tn, d)) for j in range(k)]
        idx_w = jnp.concatenate(cols, axis=-1)                      # (TN, k*d)
    else:
        idx_w = idx                                                 # (TN, 1) broadcasts
    # One mul, one add, one transcendental per element (cos(x) == sin(x + pi/2)).
    out_ref[...] = jnp.sin(idx_w * coef_ref[0:1, :] + coef_ref[1:2, :])


@functools.lru_cache(maxsize=None)
def _sin_coef(embed_dim, k):
    d = jnp.arange(embed_dim, dtype=jnp.float32)
    even_d = d - (d % 2)                                            # 0,0,2,2,4,4,...
    scale = 10000.0 ** (-even_d / embed_dim)                        # (D,)
    phase = (jnp.arange(embed_dim) % 2).astype(jnp.float32) * (jnp.pi / 2.0)
    return jnp.stack([jnp.tile(scale, k), jnp.tile(phase, k)], axis=0)   # (2, k*D)


def _pack_factor(embed_dim):
    if embed_dim % 128 == 0:
        return 1
    k = math.lcm(embed_dim, 128) // embed_dim                       # works for any even D
    return k if k <= 16 else 1


def _sin_path(flat_idx, embed_dim, tile_rows):
    n = flat_idx.shape[0]
    k = _pack_factor(embed_dim)
    lane_w = k * embed_dim
    coef = _sin_coef(int(embed_dim), k)
    n_rows = -(-n // k)
    tile_rows = _choose_tile_rows(tile_rows, n_rows, lane_w)
    n_rows_pad = -(-n_rows // tile_rows) * tile_rows
    flat_idx = jnp.pad(flat_idx, (0, n_rows_pad * k - n))           # pad rows -> pos 0, sliced away
    idx2 = flat_idx.reshape(n_rows_pad, k)
    kernel = functools.partial(_sin_pe_kernel, k=k, d=embed_dim)
    out = pl.pallas_call(
        kernel,
        out_shape=jax.ShapeDtypeStruct((n_rows_pad, lane_w), jnp.float32),
        grid_spec=pltpu.PrefetchScalarGridSpec(
            num_scalar_prefetch=0,
            grid=(n_rows_pad // tile_rows,),
            in_specs=[
                pl.BlockSpec((tile_rows, k), lambda i: (i, 0)),     # packed indices
                pl.BlockSpec((2, lane_w), lambda i: (0, 0)),        # resident scale/phase rows
            ],
            out_specs=pl.BlockSpec((tile_rows, lane_w), lambda i: (i, 0)),
        ),
        compiler_params=pltpu.CompilerParams(dimension_semantics=("parallel",)),
    )(idx2, coef)
    # Free (metadata-only) unpack: (rows, k*D) row-major == (rows*k, D).
    return out.reshape(n_rows_pad * k, embed_dim)[:n]


# ---------------------------------------------------------------------------
# Public wrapper
# ---------------------------------------------------------------------------
def sinusoidal_positional_encoding(pos_indices, context_length, embed_dim, *,
                                   tile_rows=None, use_table=None):
    """Pallas equivalent of SinusoidalPositionalEncoding(context_length, embed_dim)(pos_indices)."""
    assert embed_dim % 2 == 0, "embed_dim must be even"
    orig_shape = tuple(pos_indices.shape)
    flat = jnp.asarray(pos_indices).reshape(-1).astype(jnp.int32)
    n = int(flat.shape[0])
    if n == 0:                                                      # empty-input guard
        return jnp.zeros(orig_shape + (embed_dim,), jnp.float32)

    if use_table is None:
        # Table path only when: table fits comfortably in VMEM, output is already
        # lane-dense, and the one-hot contraction (CL MACs/elem on the MXU) stays
        # far above the HBM-write roofline on all generations.
        use_table = (embed_dim % 128 == 0
                     and context_length <= 512
                     and context_length * embed_dim <= (1 << 20))

    if use_table:
        out = _gather_path(flat, context_length, embed_dim, tile_rows)
    else:
        out = _sin_path(flat, embed_dim, tile_rows)
    return out.reshape(*orig_shape, embed_dim)


# ---------------------------------------------------------------------------
# Reference + self-test
# ---------------------------------------------------------------------------
def _reference(pos_indices, context_length, embed_dim):
    pos = jnp.arange(context_length, dtype=jnp.float32)
    even_dims = jnp.arange(0, embed_dim, 2, dtype=jnp.float32)
    scale_factors = 10000.0 ** (-even_dims / embed_dim)
    scaled_pos = pos[:, None] * scale_factors
    pos_enc = jnp.zeros((context_length, embed_dim), jnp.float32)
    pos_enc = pos_enc.at[:, 0::2].set(jnp.sin(scaled_pos))
    pos_enc = pos_enc.at[:, 1::2].set(jnp.cos(scaled_pos))
    return pos_enc[pos_indices]


if __name__ == "__main__":
    key = jax.random.PRNGKey(0)
    k1, k2, k3 = jax.random.split(key, 3)

    # Case 1: D=32 -> sin-recompute path with lane packing k = lcm(32,128)//32 = 4.
    cl1, d1 = 64, 32
    idx1 = jax.random.randint(k1, (2, 8), 0, cl1, dtype=jnp.int32)
    out1 = jax.block_until_ready(sinusoidal_positional_encoding(idx1, cl1, d1))
    ref1 = _reference(idx1, cl1, d1)
    assert out1.shape == (2, 8, d1) and out1.dtype == jnp.float32
    assert jnp.allclose(out1, ref1, atol=2e-5, rtol=2e-5), "mismatch (sin path, D=32)"

    # Case 2: D=256, small table -> MXU one-hot gather path.
    cl2, d2 = 128, 256
    idx2 = jax.random.randint(k2, (3, 5), 0, cl2, dtype=jnp.int32)
    out2 = jax.block_until_ready(sinusoidal_positional_encoding(idx2, cl2, d2))
    ref2 = _reference(idx2, cl2, d2)
    assert out2.shape == (3, 5, d2) and out2.dtype == jnp.float32
    assert jnp.allclose(out2, ref2, atol=2e-5, rtol=2e-5), "mismatch (table path, D=256)"

    # Case 3: same shapes, forced onto the sin-recompute fallback (k=1, lane-dense).
    out3 = jax.block_until_ready(
        sinusoidal_positional_encoding(idx2, cl2, d2, use_table=False))
    assert jnp.allclose(out3, ref2, atol=2e-5, rtol=2e-5), "mismatch (sin path, D=256)"

    # Case 4: D=192 (neither divisor nor multiple of 128) -> lcm packing k=2, lane_w=384.
    cl4, d4 = 64, 192
    idx4 = jax.random.randint(k3, (4, 6), 0, cl4, dtype=jnp.int32)
    out4 = jax.block_until_ready(sinusoidal_positional_encoding(idx4, cl4, d4))
    ref4 = _reference(idx4, cl4, d4)
    assert out4.shape == (4, 6, d4)
    assert jnp.allclose(out4, ref4, atol=2e-5, rtol=2e-5), "mismatch (sin path, D=192)"

    print("KERNEL_OK")
</pallas_src>

<mosaic_0001>
module attributes {stable_mosaic.version = 11 : i64} {
  func.func @_sin_pe_kernel(%arg0: i32, %arg1: memref<8x4xi32, #tpu.memory_space<vmem>>, %arg2: memref<2x128xf32, #tpu.memory_space<vmem>>, %arg3: memref<8x128xf32, #tpu.memory_space<vmem>>) attributes {dimension_semantics = [#tpu.dimension_semantics<parallel>], iteration_bounds = array<i64: 1>, scalar_prefetch = 0 : i64, scratch_operands = 0 : i64, tpu.core_type = #tpu.core_type<tc>, window_params = [{transform_indices = @transform_0, window_bounds = array<i64: 8, 4>}, {pipeline_mode = #tpu.pipeline_mode<synchronous>, transform_indices = @transform_1, window_bounds = array<i64: 2, 128>}, {transform_indices = @transform_2, window_bounds = array<i64: 8, 128>}]} {
    %c0 = arith.constant 0 : index
    %c0_0 = arith.constant 0 : index
    %0 = vector.load %arg1[%c0, %c0_0] : memref<8x4xi32, #tpu.memory_space<vmem>>, vector<8x4xi32>
    %1 = arith.sitofp %0 : vector<8x4xi32> to vector<8x4xf32>
    %2 = vector.extract_strided_slice %1 {offsets = [0, 0], sizes = [8, 1], strides = [1, 1]} : vector<8x4xf32> to vector<8x1xf32>
    %3 = vector.shape_cast %2 : vector<8x1xf32> to vector<8x1xf32>
    %4 = vector.broadcast %3 : vector<8x1xf32> to vector<8x32xf32>
    %5 = vector.extract_strided_slice %1 {offsets = [0, 1], sizes = [8, 1], strides = [1, 1]} : vector<8x4xf32> to vector<8x1xf32>
    %6 = vector.shape_cast %5 : vector<8x1xf32> to vector<8x1xf32>
    %7 = vector.broadcast %6 : vector<8x1xf32> to vector<8x32xf32>
    %8 = vector.extract_strided_slice %1 {offsets = [0, 2], sizes = [8, 1], strides = [1, 1]} : vector<8x4xf32> to vector<8x1xf32>
    %9 = vector.shape_cast %8 : vector<8x1xf32> to vector<8x1xf32>
    %10 = vector.broadcast %9 : vector<8x1xf32> to vector<8x32xf32>
    %11 = vector.extract_strided_slice %1 {offsets = [0, 3], sizes = [8, 1], strides = [1, 1]} : vector<8x4xf32> to vector<8x1xf32>
    %12 = vector.shape_cast %11 : vector<8x1xf32> to vector<8x1xf32>
    %13 = vector.broadcast %12 : vector<8x1xf32> to vector<8x32xf32>
    %14 = tpu.concatenate %4, %7, %10, %13 in 1 : vector<8x32xf32>, vector<8x32xf32>, vector<8x32xf32>, vector<8x32xf32> -> vector<8x128xf32>
    %c0_1 = arith.constant 0 : index
    %c0_2 = arith.constant 0 : index
    %15 = vector.load %arg2[%c0_1, %c0_2] : memref<2x128xf32, #tpu.memory_space<vmem>>, vector<1x128xf32>
    %16 = vector.broadcast %15 : vector<1x128xf32> to vector<8x128xf32>
    %17 = arith.mulf %14, %16 : vector<8x128xf32>
    %c1 = arith.constant 1 : index
    %c0_3 = arith.constant 0 : index
    %18 = vector.load %arg2[%c1, %c0_3] : memref<2x128xf32, #tpu.memory_space<vmem>>, vector<1x128xf32>
    %19 = vector.broadcast %18 : vector<1x128xf32> to vector<8x128xf32>
    %20 = arith.addf %17, %19 : vector<8x128xf32>
    %21 = math.sin %20 : vector<8x128xf32>
    %c0_4 = arith.constant 0 : index
    %c0_5 = arith.constant 0 : index
    %22 = vector.load %arg3[%c0_4, %c0_5] : memref<8x128xf32, #tpu.memory_space<vmem>>, vector<8x128xf32>
    tpu.vector_store %arg3[%c0_4, %c0_5], %21 {strides = array<i32>} : memref<8x128xf32, #tpu.memory_space<vmem>>, vector<8x128xf32>,
    return
  }
  func.func @transform_0(%arg0: i32) -> (i32, i32) {
    %c0_i32 = arith.constant 0 : i32
    %c0_i32_0 = arith.constant 0 : i32
    return %arg0, %c0_i32 : i32, i32
  }
  func.func @transform_1(%arg0: i32) -> (i32, i32) {
    %c0_i32 = arith.constant 0 : i32
    %c0_i32_0 = arith.constant 0 : i32
    %c0_i32_1 = arith.constant 0 : i32
    return %c0_i32, %c0_i32_0 : i32, i32
  }
  func.func @transform_2(%arg0: i32) -> (i32, i32) {
    %c0_i32 = arith.constant 0 : i32
    %c0_i32_0 = arith.constant 0 : i32
    return %arg0, %c0_i32 : i32, i32
  }
}

</mosaic_0001>

<llo_original>
// kernel: tpu_custom_call.1
$region0: #{tpu_custom_call.1}
  #allocation0 [shape = 'u32[]', space=smem, size = 0x4, offset = 0x4, fixed_abs, tag = 'smem constant byte address 0x4 - core index']
  #allocation1 [shape = 'u32[144,128]{1,0:T(1,128)}', space=vmem, size = 0x12000, scoped, tag = 'internal scratch']
  %s0 = inlined_call_operand.vmem [shape: s32[8,4], index: 0, kind: input, shape index: {}]
  %s1 = inlined_call_operand.vmem [shape: f32[2,128], index: 1, kind: input, shape index: {}]
  %s2 = inlined_call_operand.hbm [shape: f32[8,128], index: 2, kind: output, shape index: {}]
  %s3 = sld [smem:[#allocation0]]
  $region18: #{tpu_custom_call.1} parent=0
    _
  %s5 = ssub.s32 1, %s3
  %s6 = scalar_select 0, %s5, %s3
  $region1: #{tpu_custom_call.1} parent=0
    #allocation2 [shape = 'u8[4096]{0}', space=vmem, size = 0x1000, scoped, tag = 'output window, operand 0, single buffered']
    #allocation3 [shape = 's32[1]{0}', space=sflag, size = 0x4, scoped, tag = 'scoped memory for tpu_custom_call.1']
    %7 = vsyncpa [#allocation3], 0
    // Predicated region
    $region2: #{tpu_custom_call.1} parent=1 // pred_check
      _
    $region3: #{tpu_custom_call.1} parent=1 // pred_check_branch
      %9 = sbr.rel (0) target = $region5
    $region4: #{tpu_custom_call.1} parent=1 // pred_region
      _
    $region5: #{tpu_custom_call.1} parent=1 // pred_fallthru
      _
    // Predicated region
    $region6: #{tpu_custom_call.1} parent=1 // pred_check
      _
    $region7: #{tpu_custom_call.1} parent=1 // pred_check_branch
      %11 = sbr.rel (0) target = $region9
    $region8: #{tpu_custom_call.1} parent=1 // pred_region
      _
    $region9: #{tpu_custom_call.1} parent=1 // pred_fallthru
      _
    %v12 = vld [vmem:[%s0] sm:$0xff]
    %v13 = vcvt.s32.f32 %v12
    %15 = vset.pattern.permute.xlu0 0
    %16 = vperm.xlu0 %15, %v13
    %v17 = vpop.permute.xlu0 %16
    %19 = vset.pattern.permute.xlu0 1
    %20 = vperm.xlu0 %19, %v13
    %v21 = vpop.permute.xlu0 %20
    %23 = vset.pattern.permute.xlu0 2
    %24 = vperm.xlu0 %23, %v13
    %v25 = vpop.permute.xlu0 %24
    %27 = vset.pattern.permute.xlu0 3
    %28 = vperm.xlu0 %27, %v13
    %v29 = vpop.permute.xlu0 %28
    %vm31 = vcmask 261120
    %v32 = vsel %vm31, %v17, %v21
    %vm33 = vcmask 523264
    %v34 = vsel %vm33, %v32, %v25
    %vm35 = vcmask 785408
    %v36 = vsel %vm35, %v34, %v29
    %v37 = vld [vmem:[%s1] sm:$0x1]
    %v38 = vlaneseq
    %v39 = vshrl.u32 %v38, 7
    %v40 = vsub.s32 0, %v39
    %v41 = vrot.slane %v37, %v40
    %v42 = vmul.f32 %v36, %v41
    %v43 = vld [vmem:[%s1 + $0x1] sm:$0x1]
    %v44 = vlaneseq
    %v45 = vshrl.u32 %v44, 7
    %v46 = vsub.s32 0, %v45
    %v47 = vrot.slane %v43, %v46
    %v48 = vadd.f32 %v42, %v47
    %v49 = vand.u32 2147483647, %v48
    %vm50 = vcmp.le.f32.partialorder %v49, 0.7853982
    %vm51 = vcmp.lt.s32.totalorder %v48, 0
    %v52 = vand.u32 %v48, 2139095040
    %v53 = vshrl.u32 %v52, 23
    %v54 = vsub.s32 %v53, 127
    %v55 = vand.u32 2147483647, %v48
    %v56 = vand.u32 %v55, 8388607
    %v57 = vor.u32 %v56, 8388608
    %v58 = vsub.s32 0, %v57
    %v59 = vadd.s32 %v54, 1
    %vm60 = vcmp.gt.s32.totalorder %v59, 0
    %v61 = vsel %vm60, %v59, 0
    %v62 = vshrl.u32 %v61, 5
    %v63 = vand.u32 %v61, 31
    %v64 = vsub.s32 32, %v63
    %v65 = vshrl.u32 683565275, %v64
    %v66 = vshll.u32 683565275, %v63
    %v67 = vshrl.u32 2475754826, %v64
    %v68 = vor.u32 %v66, %v67
    %v69 = vshll.u32 2475754826, %v63
    %v70 = vshrl.u32 2131351028, %v64
    %v71 = vor.u32 %v69, %v70
    %v72 = vshll.u32 2131351028, %v63
    %v73 = vshrl.u32 2102212464, %v64
    %v74 = vor.u32 %v72, %v73
    %v75 = vshll.u32 2102212464, %v63
    %v76 = vshrl.u32 920167782, %v64
    %v77 = vor.u32 %v75, %v76
    %v78 = vshll.u32 920167782, %v63
    %v79 = vshrl.u32 1326507024, %v64
    %v80 = vor.u32 %v78, %v79
    %vm81 = vcmp.lt.s32.totalorder %v62, 1
    %vm82 = vcmp.lt.s32.totalorder %v62, 2
    %vm83 = vcmp.lt.s32.totalorder %v62, 3
    %vm84 = vcmp.lt.s32.totalorder %v62, 4
    %v85 = vsel %vm81, %v65, %v68
    %v86 = vsel %vm84, %v74, 2102212464
    %v87 = vsel %vm83, %v71, %v86
    %v88 = vsel %vm82, %v85, %v87
    %v89 = vsel %vm81, %v68, %v71
    %v90 = vsel %vm84, %v77, 920167782
    %v91 = vsel %vm83, %v74, %v90
    %v92 = vsel %vm82, %v89, %v91
    %v93 = vsel %vm81, %v71, %v74
    %v94 = vsel %vm84, %v80, 1326507024
    %v95 = vsel %vm83, %v77, %v94
    %v96 = vsel %vm82, %v93, %v95
    %v97 = vshll.u32 %v57, 8
    %v98 = vmul.u32.u64.compose %v97, %v96
    %v99 = vextract.low.u32 %v98
    %v100 = vextract.high.u32 %v98
    %v101 = vmul.u32.u64.compose %v97, %v92
    %v102 = vextract.low.u32 %v101
    %v103 = vextract.high.u32 %v101
    %v104 = vmul.u32 %v97, %v88
    %v105 = vadd.s32 %v100, %v102
    %vm106 = vc.u32 %v100, %v102
    %v107 = vadd.s32 %v103, 1
    %v108 = vsel %vm106, %v107, %v103
    %v109 = vadd.s32 %v104, %v108
    %v110 = vadd.s32 %v109, 536870912
    %v111 = vshrl.u32 %v110, 30
    %v112 = vshll.u32 %v111, 30
    %v113 = vsub.s32 %v109, %v112
    %vm114 = vcmp.lt.s32.totalorder %v113, 0
    %v115 = vsub.s32 0, %v113
    %v116 = vsel %vm114, %v115, %v113
    %v117 = vclz %v116
    %v118 = vsub.s32 %v117, 2
    %vm119 = vcmp.gt.s32.totalorder 0, %v118
    %v120 = vsel %vm119, 0, %v118
    %v121 = vsub.s32 32, %v120
    %v122 = vshll.u32 %v113, %v120
    %v123 = vshrl.u32 %v105, %v121
    %v124 = vor.u32 %v122, %v123
    %v125 = vsub.s32 4294967266, %v120
    %v126 = vadd.s32 %v125, 127
    %v127 = vshll.u32 %v126, 23
    %v128 = vor.u32 4788187, %v127
    %v129 = vand.u32 2147483647, %v128
    %v131 = vcvt.s32.f32 %v124
    %v132 = vmul.f32 %v131, %v129
    %v133 = vxor.u32 %v132, 2147483648
    %v134 = vsel %vm51, %v133, %v132
    %v135 = vsub.s32 4, %v111
    %v136 = vsel %vm51, %v135, %v111
    %v137 = vsel %vm50, %v48, %v134
    %v138 = vsel %vm50, 0, %v136
    %v139 = vcosq.f32.pop %v137
    %v140 = vsinq.f32.pop %v137
    %vm141 = vweird.f32 %v48
    %v142 = vadd.s32 %v138, 3
    %v143 = vand.u32 %v142, 3
    %vm144 = vcmp.lt.s32.totalorder %v143, 2
    %vm145 = vcmp.eq.s32.totalorder %v143, 0
    %v146 = vxor.u32 %v140, 2147483648
    %v147 = vsel %vm145, %v139, %v146
    %vm148 = vcmp.eq.s32.totalorder %v143, 2
    %v149 = vxor.u32 %v139, 2147483648
    %v150 = vsel %vm148, %v149, %v140
    %v151 = vsel %vm144, %v147, %v150
    %v152 = vsel %vm141, nan, %v151
    %153 = vst [vmem:[#allocation2] sm:$0xff] %v152
    // Predicated region
    $region10: #{tpu_custom_call.1} parent=1 // pred_check
      _
    $region11: #{tpu_custom_call.1} parent=1 // pred_check_branch
      %155 = sbr.rel (0) target = $region13
    $region12: #{tpu_custom_call.1} parent=1 // pred_region
      %s157 = ssub.s32 128, 128
      %158 = vsyncadd [#allocation3], %s157
      %s160 = sshll.u32 [#allocation2], 4
      %s161 = int_to_ptr.vmem [resolvable:$true] %s160
      %163 = dma.vmem_to_hbm [thread:$0]  %s161, 128, %s2, [#allocation3]
    $region13: #{tpu_custom_call.1} parent=1 // pred_fallthru
      _
    // Predicated region
    $region14: #{tpu_custom_call.1} parent=1 // pred_check
      _
    $region15: #{tpu_custom_call.1} parent=1 // pred_check_branch
      %165 = sbr.rel (0) target = $region17
    $region16: #{tpu_custom_call.1} parent=1 // pred_region
      %166 = dma.done [#allocation3], 128
    $region17: #{tpu_custom_call.1} parent=1 // pred_fallthru
      _
    %167 = vsyncpa [#allocation3], 1

</llo_original>
